<compile_context>
chip_gen: v7x
topology: tpu7x:2x2x1
jax: 0.10.0
libtpu: 0.0.40
codegen_flags: <defaults>
</compile_context>

<pallas_src>
import math

import numpy as np
import jax
import jax.numpy as jnp
from jax.experimental import pallas as pl
from jax.experimental.pallas import tpu as pltpu


def _round_up(x, m):
    return (x + m - 1) // m * m


def _pick_row_tile(H, W, p):
    """Smallest divisor TH of H such that the flattened row tile TH*W is
    lane-dense (multiple of 128) and large enough to contain the conv halo."""
    for th in range(1, H + 1):
        if H % th == 0 and (th * W) % 128 == 0 and th * W >= 2 * p * (W + 1):
            return th
    raise NotImplementedError(
        "TODO(synk): no lane-dense row tile exists for this (H, W); "
        "needs a padded-tile fallback path.")


def conv_layer_forward(x_nchw, weight, bias, kernel_size, stride=1, padding=None):
    """ConvLayer forward: conv2d (stride=1, 'same' padding) + bias + ReLU.

    x_nchw: (N, Cin, H, W), weight: (Cout, Cin, KH, KW), bias: (Cout,).
    Returns (N, Cout, H, W).
    """
    if padding is None:
        padding = kernel_size // 2
    # TODO(synk): only stride=1 (the module default) is implemented.
    assert stride == 1, "only stride=1 is supported"

    N, Cin, H, W = x_nchw.shape
    Cout, cin_w, KH, KW = weight.shape
    assert cin_w == Cin and KH == kernel_size and KW == kernel_size
    p = padding
    assert KH == 2 * p + 1 and KW == 2 * p + 1, \
        "TODO(synk): only odd 'same' convolutions (padding=k//2) are implemented"

    TH = _pick_row_tile(H, W, p)        # output rows per grid step
    nH = H // TH
    TILE = TH * W                       # lanes per row tile (multiple of 128)
    Cin_p = _round_up(Cin, 8)           # sublane-align the per-tap channel groups
    K2C = KH * KW * Cin_p

    # ---- wrapper prep (cheap; no full-array transposes) --------------------
    # Flatten spatial onto one lane axis and zero-pad so that
    #   xf[n, ci, i*TILE + kh*W + kw + q] == x[n, ci, i*TH + q//W + kh - p, q%W + kw - p]
    # for in-bounds rows; out-of-bounds rows land in the zero pad, out-of-bounds
    # columns are masked inside the kernel.
    Lp = (nH + 1) * TILE                # +1 tile so the "next tile" halo view exists
    left = p * W + p
    xf = jnp.pad(x_nchw.reshape(N, Cin, H * W),
                 ((0, 0), (0, Cin_p - Cin), (left, Lp - H * W - left)))

    # Weights as a single (Cout, KH*KW*Cin_p) matrix, columns ordered (kh, kw, ci),
    # zero-filled for the padded input channels.
    w_p = jnp.pad(weight, ((0, 0), (0, Cin_p - Cin), (0, 0), (0, 0)))
    w2 = jnp.transpose(w_p, (0, 2, 3, 1)).reshape(Cout, K2C)
    b2 = bias.astype(jnp.float32).reshape(Cout, 1)

    # Column index of every lane in a row tile (mask for W-direction padding).
    col_ids = jnp.asarray((np.arange(TILE) % W)[None, :], dtype=jnp.int32)

    def kernel(xc_ref, xn_ref, w_ref, b_ref, col_ref, out_ref):
        # xc_ref/xn_ref: (Cin_p, TILE)  current / next flattened row tile of x
        # w_ref: (Cout, K2C)   b_ref: (Cout, 1)   col_ref: (1, TILE)
        # out_ref: (Cout, TILE) -- lane-dense store (TILE % 128 == 0)
        win = jnp.concatenate([xc_ref[...], xn_ref[...]], axis=-1)   # (Cin_p, 2*TILE)
        col = col_ref[...]                                           # (1, TILE)

        # im2col: stack the KH*KW shifted windows, then ONE MXU contraction
        # instead of KH*KW tiny K=Cin matmuls.
        taps = []
        for kh in range(KH):
            for kw in range(KW):
                off = kh * W + kw
                tap = win[:, off:off + TILE]                         # (Cin_p, TILE)
                lo, hi = p - kw, W + p - kw
                if lo > 0 or hi < W:                                 # horizontal zero pad
                    ok = jnp.logical_and(col >= lo, col < hi)
                    tap = jnp.where(ok, tap, jnp.zeros_like(tap))
                taps.append(tap)
        patches = jnp.concatenate(taps, axis=0)                      # (K2C, TILE)

        # Native-dtype MXU operands, f32 accumulation; f32 bias + ReLU epilogue.
        acc = jnp.dot(w_ref[...], patches, preferred_element_type=jnp.float32)
        acc = acc + b_ref[...]
        out_ref[...] = jnp.maximum(acc, 0.0).astype(out_ref.dtype)

    flops = 2 * N * H * W * KH * KW * Cin * Cout
    itemsize = x_nchw.dtype.itemsize
    bytes_accessed = (x_nchw.size + weight.size + bias.size
                      + N * Cout * H * W) * itemsize

    out_flat = pl.pallas_call(
        kernel,
        out_shape=jax.ShapeDtypeStruct((N, Cout, H * W), x_nchw.dtype),
        grid_spec=pltpu.PrefetchScalarGridSpec(
            num_scalar_prefetch=0,
            grid=(N, nH),    # row tiles innermost -> weights/bias stay VMEM-resident
            in_specs=[
                # current row tile and the next one (halo) as two blocked views
                # of the same array.  TODO(synk): shrink the halo view / manual
                # DMA to avoid the ~2x activation re-read for huge images.
                pl.BlockSpec((pl.Squeezed(), Cin_p, TILE), lambda n, i: (n, 0, i)),
                pl.BlockSpec((pl.Squeezed(), Cin_p, TILE), lambda n, i: (n, 0, i + 1)),
                pl.BlockSpec((Cout, K2C), lambda n, i: (0, 0)),
                pl.BlockSpec((Cout, 1), lambda n, i: (0, 0)),
                pl.BlockSpec((1, TILE), lambda n, i: (0, 0)),
            ],
            out_specs=pl.BlockSpec((pl.Squeezed(), Cout, TILE),
                                   lambda n, i: (n, 0, i)),
        ),
        compiler_params=pltpu.CompilerParams(
            dimension_semantics=("parallel", "parallel"),
            # Explicit scoped-VMEM limit; per-block footprint here is tiny and
            # stays well under v7x's 64 MiB physical VMEM for realistic tiles.
            vmem_limit_bytes=32 * 1024 * 1024,
        ),
        cost_estimate=pl.CostEstimate(flops=flops, transcendentals=0,
                                      bytes_accessed=bytes_accessed),
    )(xf, xf, w2, b2, col_ids)

    return out_flat.reshape(N, Cout, H, W)   # contiguous reshape, no data movement


def reference_forward(x_nchw, weight, bias, padding):
    out = jax.lax.conv_general_dilated(
        x_nchw, weight,
        window_strides=(1, 1),
        padding=[(padding, padding), (padding, padding)],
        dimension_numbers=("NCHW", "OIHW", "NCHW"),
    )
    out = out + bias.reshape(1, -1, 1, 1)
    return jnp.maximum(out, 0.0)


if __name__ == "__main__":
    # Shapes consistent with ConvLayer(in_channels=4, out_channels=8, kernel_size=3)
    N, Cin, Cout, H, W, K = 2, 4, 8, 16, 16, 3
    pad = K // 2
    w_scale = math.sqrt(1.0 / Cin)

    key = jax.random.PRNGKey(0)
    kx, kw = jax.random.split(key)
    x = jax.random.normal(kx, (N, Cin, H, W), dtype=jnp.float32)
    weight = jax.random.uniform(kw, (Cout, Cin, K, K), dtype=jnp.float32,
                                minval=-w_scale, maxval=w_scale)
    bias = jnp.zeros((Cout,), dtype=jnp.float32)

    out = conv_layer_forward(x, weight, bias, kernel_size=K)
    out = jax.block_until_ready(out)

    ref = jax.block_until_ready(reference_forward(x, weight, bias, pad))
    assert out.shape == (N, Cout, H, W)
    assert jnp.allclose(out, ref, atol=1e-5, rtol=1e-5), "mismatch vs reference conv"

    print("KERNEL_OK")
</pallas_src>

<mosaic_0001>
module attributes {stable_mosaic.version = 11 : i64} {
  func.func @kernel(%arg0: i32, %arg1: i32, %arg2: memref<1x8x128xf32, #tpu.memory_space<vmem>>, %arg3: memref<1x8x128xf32, #tpu.memory_space<vmem>>, %arg4: memref<8x72xf32, #tpu.memory_space<vmem>>, %arg5: memref<8x1xf32, #tpu.memory_space<vmem>>, %arg6: memref<1x128xi32, #tpu.memory_space<vmem>>, %arg7: memref<1x8x128xf32, #tpu.memory_space<vmem>>) attributes {dimension_semantics = [#tpu.dimension_semantics<parallel>, #tpu.dimension_semantics<parallel>], iteration_bounds = array<i64: 2, 2>, scalar_prefetch = 0 : i64, scratch_operands = 0 : i64, tpu.core_type = #tpu.core_type<tc>, window_params = [{transform_indices = @transform_0, window_bounds = array<i64: 1, 8, 128>}, {transform_indices = @transform_1, window_bounds = array<i64: 1, 8, 128>}, {pipeline_mode = #tpu.pipeline_mode<synchronous>, transform_indices = @transform_2, window_bounds = array<i64: 8, 72>}, {pipeline_mode = #tpu.pipeline_mode<synchronous>, transform_indices = @transform_3, window_bounds = array<i64: 8, 1>}, {pipeline_mode = #tpu.pipeline_mode<synchronous>, transform_indices = @transform_4, window_bounds = array<i64: 1, 128>}, {transform_indices = @transform_5, window_bounds = array<i64: 1, 8, 128>}]} {
    %c0 = arith.constant 0 : index
    %c0_0 = arith.constant 0 : index
    %c0_1 = arith.constant 0 : index
    %0 = vector.load %arg2[%c0, %c0_0, %c0_1] : memref<1x8x128xf32, #tpu.memory_space<vmem>>, vector<1x8x128xf32>
    %1 = vector.shape_cast %0 : vector<1x8x128xf32> to vector<8x128xf32>
    %c0_2 = arith.constant 0 : index
    %c0_3 = arith.constant 0 : index
    %c0_4 = arith.constant 0 : index
    %2 = vector.load %arg3[%c0_2, %c0_3, %c0_4] : memref<1x8x128xf32, #tpu.memory_space<vmem>>, vector<1x8x128xf32>
    %3 = vector.shape_cast %2 : vector<1x8x128xf32> to vector<8x128xf32>
    %4 = tpu.concatenate %1, %3 in 1 : vector<8x128xf32>, vector<8x128xf32> -> vector<8x256xf32>
    %c0_5 = arith.constant 0 : index
    %c0_6 = arith.constant 0 : index
    %5 = vector.load %arg6[%c0_5, %c0_6] : memref<1x128xi32, #tpu.memory_space<vmem>>, vector<1x128xi32>
    %6 = vector.extract_strided_slice %4 {offsets = [0, 0], sizes = [8, 128], strides = [1, 1]} : vector<8x256xf32> to vector<8x128xf32>
    %c1_i32 = arith.constant 1 : i32
    %7 = vector.broadcast %c1_i32 : i32 to vector<1x128xi32>
    %8 = arith.cmpi sge, %5, %7 : vector<1x128xi32>
    %c17_i32 = arith.constant 17 : i32
    %9 = vector.broadcast %c17_i32 : i32 to vector<1x128xi32>
    %10 = arith.cmpi slt, %5, %9 : vector<1x128xi32>
    %11 = arith.andi %8, %10 : vector<1x128xi1>
    %cst = arith.constant 0.000000e+00 : f32
    %12 = vector.broadcast %cst : f32 to vector<8x128xf32>
    %13 = vector.shape_cast %11 : vector<1x128xi1> to vector<1x128xi1>
    %14 = vector.broadcast %13 : vector<1x128xi1> to vector<8x128xi1>
    %15 = arith.select %14, %6, %12 : vector<8x128xi1>, vector<8x128xf32>
    %16 = vector.extract_strided_slice %4 {offsets = [0, 1], sizes = [8, 128], strides = [1, 1]} : vector<8x256xf32> to vector<8x128xf32>
    %17 = vector.extract_strided_slice %4 {offsets = [0, 2], sizes = [8, 128], strides = [1, 1]} : vector<8x256xf32> to vector<8x128xf32>
    %c-1_i32 = arith.constant -1 : i32
    %18 = vector.broadcast %c-1_i32 : i32 to vector<1x128xi32>
    %19 = arith.cmpi sge, %5, %18 : vector<1x128xi32>
    %c15_i32 = arith.constant 15 : i32
    %20 = vector.broadcast %c15_i32 : i32 to vector<1x128xi32>
    %21 = arith.cmpi slt, %5, %20 : vector<1x128xi32>
    %22 = arith.andi %19, %21 : vector<1x128xi1>
    %cst_7 = arith.constant 0.000000e+00 : f32
    %23 = vector.broadcast %cst_7 : f32 to vector<8x128xf32>
    %24 = vector.shape_cast %22 : vector<1x128xi1> to vector<1x128xi1>
    %25 = vector.broadcast %24 : vector<1x128xi1> to vector<8x128xi1>
    %26 = arith.select %25, %17, %23 : vector<8x128xi1>, vector<8x128xf32>
    %27 = vector.extract_strided_slice %4 {offsets = [0, 16], sizes = [8, 128], strides = [1, 1]} : vector<8x256xf32> to vector<8x128xf32>
    %c1_i32_8 = arith.constant 1 : i32
    %28 = vector.broadcast %c1_i32_8 : i32 to vector<1x128xi32>
    %29 = arith.cmpi sge, %5, %28 : vector<1x128xi32>
    %c17_i32_9 = arith.constant 17 : i32
    %30 = vector.broadcast %c17_i32_9 : i32 to vector<1x128xi32>
    %31 = arith.cmpi slt, %5, %30 : vector<1x128xi32>
    %32 = arith.andi %29, %31 : vector<1x128xi1>
    %cst_10 = arith.constant 0.000000e+00 : f32
    %33 = vector.broadcast %cst_10 : f32 to vector<8x128xf32>
    %34 = vector.shape_cast %32 : vector<1x128xi1> to vector<1x128xi1>
    %35 = vector.broadcast %34 : vector<1x128xi1> to vector<8x128xi1>
    %36 = arith.select %35, %27, %33 : vector<8x128xi1>, vector<8x128xf32>
    %37 = vector.extract_strided_slice %4 {offsets = [0, 17], sizes = [8, 128], strides = [1, 1]} : vector<8x256xf32> to vector<8x128xf32>
    %38 = vector.extract_strided_slice %4 {offsets = [0, 18], sizes = [8, 128], strides = [1, 1]} : vector<8x256xf32> to vector<8x128xf32>
    %c-1_i32_11 = arith.constant -1 : i32
    %39 = vector.broadcast %c-1_i32_11 : i32 to vector<1x128xi32>
    %40 = arith.cmpi sge, %5, %39 : vector<1x128xi32>
    %c15_i32_12 = arith.constant 15 : i32
    %41 = vector.broadcast %c15_i32_12 : i32 to vector<1x128xi32>
    %42 = arith.cmpi slt, %5, %41 : vector<1x128xi32>
    %43 = arith.andi %40, %42 : vector<1x128xi1>
    %cst_13 = arith.constant 0.000000e+00 : f32
    %44 = vector.broadcast %cst_13 : f32 to vector<8x128xf32>
    %45 = vector.shape_cast %43 : vector<1x128xi1> to vector<1x128xi1>
    %46 = vector.broadcast %45 : vector<1x128xi1> to vector<8x128xi1>
    %47 = arith.select %46, %38, %44 : vector<8x128xi1>, vector<8x128xf32>
    %48 = vector.extract_strided_slice %4 {offsets = [0, 32], sizes = [8, 128], strides = [1, 1]} : vector<8x256xf32> to vector<8x128xf32>
    %c1_i32_14 = arith.constant 1 : i32
    %49 = vector.broadcast %c1_i32_14 : i32 to vector<1x128xi32>
    %50 = arith.cmpi sge, %5, %49 : vector<1x128xi32>
    %c17_i32_15 = arith.constant 17 : i32
    %51 = vector.broadcast %c17_i32_15 : i32 to vector<1x128xi32>
    %52 = arith.cmpi slt, %5, %51 : vector<1x128xi32>
    %53 = arith.andi %50, %52 : vector<1x128xi1>
    %cst_16 = arith.constant 0.000000e+00 : f32
    %54 = vector.broadcast %cst_16 : f32 to vector<8x128xf32>
    %55 = vector.shape_cast %53 : vector<1x128xi1> to vector<1x128xi1>
    %56 = vector.broadcast %55 : vector<1x128xi1> to vector<8x128xi1>
    %57 = arith.select %56, %48, %54 : vector<8x128xi1>, vector<8x128xf32>
    %58 = vector.extract_strided_slice %4 {offsets = [0, 33], sizes = [8, 128], strides = [1, 1]} : vector<8x256xf32> to vector<8x128xf32>
    %59 = vector.extract_strided_slice %4 {offsets = [0, 34], sizes = [8, 128], strides = [1, 1]} : vector<8x256xf32> to vector<8x128xf32>
    %c-1_i32_17 = arith.constant -1 : i32
    %60 = vector.broadcast %c-1_i32_17 : i32 to vector<1x128xi32>
    %61 = arith.cmpi sge, %5, %60 : vector<1x128xi32>
    %c15_i32_18 = arith.constant 15 : i32
    %62 = vector.broadcast %c15_i32_18 : i32 to vector<1x128xi32>
    %63 = arith.cmpi slt, %5, %62 : vector<1x128xi32>
    %64 = arith.andi %61, %63 : vector<1x128xi1>
    %cst_19 = arith.constant 0.000000e+00 : f32
    %65 = vector.broadcast %cst_19 : f32 to vector<8x128xf32>
    %66 = vector.shape_cast %64 : vector<1x128xi1> to vector<1x128xi1>
    %67 = vector.broadcast %66 : vector<1x128xi1> to vector<8x128xi1>
    %68 = arith.select %67, %59, %65 : vector<8x128xi1>, vector<8x128xf32>
    %69 = tpu.concatenate %15, %16, %26, %36, %37, %47, %57, %58, %68 in 0 : vector<8x128xf32>, vector<8x128xf32>, vector<8x128xf32>, vector<8x128xf32>, vector<8x128xf32>, vector<8x128xf32>, vector<8x128xf32>, vector<8x128xf32>, vector<8x128xf32> -> vector<72x128xf32>
    %c0_20 = arith.constant 0 : index
    %c0_21 = arith.constant 0 : index
    %70 = vector.load %arg4[%c0_20, %c0_21] : memref<8x72xf32, #tpu.memory_space<vmem>>, vector<8x72xf32>
    %cst_22 = arith.constant dense<0.000000e+00> : vector<8x128xf32>
    %71 = tpu.matmul %70, %69, %cst_22 {dimension_numbers = #tpu.dot_dimension_numbers<[1], [0], [0], [1], [0, 0, 1, 1], [], []>} : vector<8x72xf32>, vector<72x128xf32>, vector<8x128xf32> -> vector<8x128xf32>
    %c0_23 = arith.constant 0 : index
    %c0_24 = arith.constant 0 : index
    %72 = vector.load %arg5[%c0_23, %c0_24] : memref<8x1xf32, #tpu.memory_space<vmem>>, vector<8x1xf32>
    %73 = vector.broadcast %72 : vector<8x1xf32> to vector<8x128xf32>
    %74 = arith.addf %71, %73 : vector<8x128xf32>
    %cst_25 = arith.constant 0.000000e+00 : f32
    %75 = vector.broadcast %cst_25 : f32 to vector<8x128xf32>
    %76 = arith.maximumf %74, %75 : vector<8x128xf32>
    %c0_26 = arith.constant 0 : index
    %c0_27 = arith.constant 0 : index
    %c0_28 = arith.constant 0 : index
    %77 = vector.load %arg7[%c0_26, %c0_27, %c0_28] : memref<1x8x128xf32, #tpu.memory_space<vmem>>, vector<1x8x128xf32>
    %78 = vector.shape_cast %77 : vector<1x8x128xf32> to vector<8x128xf32>
    %79 = vector.shape_cast %76 : vector<8x128xf32> to vector<1x8x128xf32>
    tpu.vector_store %arg7[%c0_26, %c0_27, %c0_28], %79 {strides = array<i32>} : memref<1x8x128xf32, #tpu.memory_space<vmem>>, vector<1x8x128xf32>,
    return
  }
  func.func @transform_0(%arg0: i32, %arg1: i32) -> (i32, i32, i32) {
    %c0_i32 = arith.constant 0 : i32
    %c0_i32_0 = arith.constant 0 : i32
    return %arg0, %c0_i32, %arg1 : i32, i32, i32
  }
  func.func @transform_1(%arg0: i32, %arg1: i32) -> (i32, i32, i32) {
    %c1_i32 = arith.constant 1 : i32
    %0 = arith.addi %arg1, %c1_i32 : i32
    %c0_i32 = arith.constant 0 : i32
    %c0_i32_0 = arith.constant 0 : i32
    return %arg0, %c0_i32, %0 : i32, i32, i32
  }
  func.func @transform_2(%arg0: i32, %arg1: i32) -> (i32, i32) {
    %c0_i32 = arith.constant 0 : i32
    %c0_i32_0 = arith.constant 0 : i32
    %c0_i32_1 = arith.constant 0 : i32
    return %c0_i32, %c0_i32_0 : i32, i32
  }
  func.func @transform_3(%arg0: i32, %arg1: i32) -> (i32, i32) {
    %c0_i32 = arith.constant 0 : i32
    %c0_i32_0 = arith.constant 0 : i32
    %c0_i32_1 = arith.constant 0 : i32
    return %c0_i32, %c0_i32_0 : i32, i32
  }
  func.func @transform_4(%arg0: i32, %arg1: i32) -> (i32, i32) {
    %c0_i32 = arith.constant 0 : i32
    %c0_i32_0 = arith.constant 0 : i32
    %c0_i32_1 = arith.constant 0 : i32
    return %c0_i32, %c0_i32_0 : i32, i32
  }
  func.func @transform_5(%arg0: i32, %arg1: i32) -> (i32, i32, i32) {
    %c0_i32 = arith.constant 0 : i32
    %c0_i32_0 = arith.constant 0 : i32
    return %arg0, %c0_i32, %arg1 : i32, i32, i32
  }
}

</mosaic_0001>

<llo_original>
// kernel: tpu_custom_call.1
$region0: #{tpu_custom_call.1}
  #allocation0 [shape = 'u32[]', space=smem, size = 0x4, offset = 0x4, fixed_abs, tag = 'smem constant byte address 0x4 - core index']
  #allocation1 [shape = 'u32[144,128]{1,0:T(1,128)}', space=vmem, size = 0x12000, scoped, tag = 'internal scratch']
  %s0 = inlined_call_operand.hbm [shape: f32[2,8,384], index: 0, kind: input, shape index: {}]
  %s1 = inlined_call_operand.hbm [shape: f32[2,8,384], index: 1, kind: input, shape index: {}]
  %s2 = inlined_call_operand.vmem [shape: f32[8,72], index: 2, kind: input, shape index: {}]
  %s3 = inlined_call_operand.vmem [shape: f32[8,1], index: 3, kind: input, shape index: {}]
  %s4 = inlined_call_operand.vmem [shape: s32[1,128], index: 4, kind: input, shape index: {}]
  %s5 = inlined_call_operand.hbm [shape: f32[2,8,256], index: 5, kind: output, shape index: {}]
  %s6 = sld [smem:[#allocation0]]
  $region61: #{tpu_custom_call.1} parent=0
    _
  %s8 = ssub.s32 1, %s6
  %s9 = scalar_select 0, %s8, %s6
  $region1: #{tpu_custom_call.1} parent=0
    #allocation2 [shape = 'u8[8192]{0}', space=vmem, size = 0x2000, scoped, tag = 'input window, operand 0']
    #allocation3 [shape = 's32[2]{0}', space=sflag, size = 0x8, scoped, tag = 'scoped memory for tpu_custom_call.1']
    #allocation4 [shape = 's32[2]{0}', space=sflag, size = 0x8, scoped, tag = 'scoped memory for tpu_custom_call.1']
    #allocation5 [shape = 'u8[8192]{0}', space=vmem, size = 0x2000, scoped, tag = 'input window, operand 1']
    #allocation6 [shape = 's32[2]{0}', space=sflag, size = 0x8, scoped, tag = 'scoped memory for tpu_custom_call.1']
    #allocation7 [shape = 'u8[8192]{0}', space=vmem, size = 0x2000, scoped, tag = 'output window, operand 0']
    %10 = vsyncpa [#allocation3], 0
    %s11 = scalar_lea.sflag [#allocation3], 1
    %12 = vsyncpa %s11, 0
    %13 = vsyncpa [#allocation6], 0
    %s14 = scalar_lea.sflag [#allocation6], 1
    %15 = vsyncpa %s14, 0
    %16 = vsyncpa [#allocation4], 0
    %s17 = scalar_lea.sflag [#allocation4], 1
    %18 = vsyncpa %s17, 0
    loop: start=0, step=1, limit=6
    $region2: #{tpu_custom_call.1} parent=1 // loop_pre_header
      _
    $region3: #{tpu_custom_call.1} parent=1 // loop_header
      %s20 = sphi 0, %s24
      %p21 = scmp.ge.s32.totalorder %s20, 6
      %s27 = sphi 0, %s39
      %s28 = sphi 0, %s35
      %s29 = sphi 0, %s27
      %s30 = sphi 0, %s28
      %s31 = sphi 0, %s29
      %s32 = sphi 0, %s30
      %s44 = sphi 0, %s46
      %s47 = sphi 0, %s44
      %s48 = sphi 0, %s47
      %s64 = sphi 0, %s48
      %s74 = sphi 0, %s76
      %s77 = sphi 0, %s74
      %s78 = sphi 0, %s77
      %s94 = sphi 0, %s78
      %s98 = sphi 0, %s98
      %s100 = sphi 0, %s98
      %s101 = sphi 0, %s100
      %s115 = sphi 0, %s101
      %s119 = sphi 0, %s119
      %s121 = sphi 0, %s119
      %s122 = sphi 0, %s121
      %s136 = sphi 0, %s122
      %s140 = sphi 0, %s140
      %s142 = sphi 0, %s140
      %s143 = sphi 0, %s142
      %s157 = sphi 0, %s143
      %s165 = sphi 0, %s167
      %s168 = sphi 0, %s165
      %s169 = sphi 0, %s168
      %s185 = sphi 0, %s169
    $region4: #{tpu_custom_call.1} parent=1 // loop_header_branch
      %23 = sbr.rel (%p21) target = $region8
    $region5: #{tpu_custom_call.1} parent=1 // loop_body
      %s25 = ssub.s32 %s20, 1
      %s26 = ssub.s32 %s20, 2
      %s33 = sadd.s32 1, %s28
      %p34 = scmp.ge.s32.totalorder %s33, 2
      %s35 = scalar_select %p34, 0, %s33
      %s36 = sadd.s32 1, %s27
      %s37 = scalar_select %p34, %s36, %s27
      %p38 = scmp.ge.s32.totalorder %s37, 2
      %s39 = scalar_select %p38, 0, %s37
      %s40 = ssub.s32 %s27, %s39
      %s41 = ssub.s32 %s28, %s35
      %s42 = sor.u32 %s40, %s41
      %p43 = scmp.eq.s32.totalorder %s42, 0
      %s45 = sadd.s32 %s44, 1
      %s46 = scalar_select %p43, %s44, %s45
      %p49 = pneg %p43
      %p50 = scmp.eq.s32.totalorder %s20, 3
      %p51 = por %p49, %p50
      %p52 = scmp.ne.s32.totalorder %s44, %s47
      %p53 = scmp.eq.s32.totalorder %s20, 0
      %p54 = por %p52, %p53
      %p55 = scmp.ne.s32.totalorder %s44, %s47
      %p56 = scmp.eq.s32.totalorder %s25, 3
      %p57 = por %p55, %p56
      %p58 = scmp.ne.s32.totalorder %s47, %s48
      %p59 = scmp.eq.s32.totalorder %s25, 0
      %p60 = por %p58, %p59
      %p61 = scmp.ne.s32.totalorder %s47, %s48
      %p62 = scmp.eq.s32.totalorder %s26, 3
      %p63 = por %p61, %p62
      %p65 = scmp.ne.s32.totalorder %s48, %s64
      %p66 = scmp.eq.s32.totalorder %s26, 0
      %p67 = por %p65, %p66
      %s68 = sadd.s32 %s28, 1
      %s69 = sadd.s32 %s35, 1
      %s70 = ssub.s32 %s27, %s39
      %s71 = ssub.s32 %s68, %s69
      %s72 = sor.u32 %s70, %s71
      %p73 = scmp.eq.s32.totalorder %s72, 0
      %s75 = sadd.s32 %s74, 1
      %s76 = scalar_select %p73, %s74, %s75
      %p79 = pneg %p73
      %p80 = scmp.eq.s32.totalorder %s20, 3
      %p81 = por %p79, %p80
      %p82 = scmp.ne.s32.totalorder %s74, %s77
      %p83 = scmp.eq.s32.totalorder %s20, 0
      %p84 = por %p82, %p83
      %p85 = scmp.ne.s32.totalorder %s74, %s77
      %p86 = scmp.eq.s32.totalorder %s25, 3
      %p87 = por %p85, %p86
      %p88 = scmp.ne.s32.totalorder %s77, %s78
      %p89 = scmp.eq.s32.totalorder %s25, 0
      %p90 = por %p88, %p89
      %p91 = scmp.ne.s32.totalorder %s77, %s78
      %p92 = scmp.eq.s32.totalorder %s26, 3
      %p93 = por %p91, %p92
      %p95 = scmp.ne.s32.totalorder %s78, %s94
      %p96 = scmp.eq.s32.totalorder %s26, 0
      %p97 = por %p95, %p96
      %s99 = sadd.s32 %s98, 1
      %p102 = scmp.eq.s32.totalorder %s20, 3
      %p103 = scmp.ne.s32.totalorder %s98, %s100
      %p104 = scmp.eq.s32.totalorder %s20, 0
      %p105 = por %p103, %p104
      %p106 = scmp.ne.s32.totalorder %s98, %s100
      %p107 = scmp.eq.s32.totalorder %s25, 3
      %p108 = por %p106, %p107
      %p109 = scmp.ne.s32.totalorder %s100, %s101
      %p110 = scmp.eq.s32.totalorder %s25, 0
      %p111 = por %p109, %p110
      %p112 = scmp.ne.s32.totalorder %s100, %s101
      %p113 = scmp.eq.s32.totalorder %s26, 3
      %p114 = por %p112, %p113
      %p116 = scmp.ne.s32.totalorder %s101, %s115
      %p117 = scmp.eq.s32.totalorder %s26, 0
      %p118 = por %p116, %p117
      %s120 = sadd.s32 %s119, 1
      %p123 = scmp.eq.s32.totalorder %s20, 3
      %p124 = scmp.ne.s32.totalorder %s119, %s121
      %p125 = scmp.eq.s32.totalorder %s20, 0
      %p126 = por %p124, %p125
      %p127 = scmp.ne.s32.totalorder %s119, %s121
      %p128 = scmp.eq.s32.totalorder %s25, 3
      %p129 = por %p127, %p128
      %p130 = scmp.ne.s32.totalorder %s121, %s122
      %p131 = scmp.eq.s32.totalorder %s25, 0
      %p132 = por %p130, %p131
      %p133 = scmp.ne.s32.totalorder %s121, %s122
      %p134 = scmp.eq.s32.totalorder %s26, 3
      %p135 = por %p133, %p134
      %p137 = scmp.ne.s32.totalorder %s122, %s136
      %p138 = scmp.eq.s32.totalorder %s26, 0
      %p139 = por %p137, %p138
      %s141 = sadd.s32 %s140, 1
      %p144 = scmp.eq.s32.totalorder %s20, 3
      %p145 = scmp.ne.s32.totalorder %s140, %s142
      %p146 = scmp.eq.s32.totalorder %s20, 0
      %p147 = por %p145, %p146
      %p148 = scmp.ne.s32.totalorder %s140, %s142
      %p149 = scmp.eq.s32.totalorder %s25, 3
      %p150 = por %p148, %p149
      %p151 = scmp.ne.s32.totalorder %s142, %s143
      %p152 = scmp.eq.s32.totalorder %s25, 0
      %p153 = por %p151, %p152
      %p154 = scmp.ne.s32.totalorder %s142, %s143
      %p155 = scmp.eq.s32.totalorder %s26, 3
      %p156 = por %p154, %p155
      %p158 = scmp.ne.s32.totalorder %s143, %s157
      %p159 = scmp.eq.s32.totalorder %s26, 0
      %p160 = por %p158, %p159
      %s161 = ssub.s32 %s27, %s39
      %s162 = ssub.s32 %s28, %s35
      %s163 = sor.u32 %s161, %s162
      %p164 = scmp.eq.s32.totalorder %s163, 0
      %s166 = sadd.s32 %s165, 1
      %s167 = scalar_select %p164, %s165, %s166
      %p170 = pneg %p164
      %p171 = scmp.eq.s32.totalorder %s20, 3
      %p172 = por %p170, %p171
      %p173 = scmp.ne.s32.totalorder %s165, %s168
      %p174 = scmp.eq.s32.totalorder %s20, 0
      %p175 = por %p173, %p174
      %p176 = scmp.ne.s32.totalorder %s165, %s168
      %p177 = scmp.eq.s32.totalorder %s25, 3
      %p178 = por %p176, %p177
      %p179 = scmp.ne.s32.totalorder %s168, %s169
      %p180 = scmp.eq.s32.totalorder %s25, 0
      %p181 = por %p179, %p180
      %p182 = scmp.ne.s32.totalorder %s168, %s169
      %p183 = scmp.eq.s32.totalorder %s26, 3
      %p184 = por %p182, %p183
      %p186 = scmp.ne.s32.totalorder %s169, %s185
      %p187 = scmp.eq.s32.totalorder %s26, 0
      %p188 = por %p186, %p187
      %p189 = scmp.le.s32.totalorder 1, %s20
      %p190 = scmp.lt.s32.totalorder %s20, 5
      %p191 = pnand %p189, %p190
      %p192 = pneg %p191
      // Predicated region
      $region9: #{tpu_custom_call.1} parent=5 // pred_check
        _
      $region10: #{tpu_custom_call.1} parent=5 // pred_check_branch
        %194 = sbr.rel (%p191) target = $region12
      $region11: #{tpu_custom_call.1} parent=5 // pred_region
        %s195 = ssub.s32 %s20, 1
        // Predicated region
        $region13: #{tpu_custom_call.1} parent=11 // pred_check
          %p196 = pneg %p111
        $region14: #{tpu_custom_call.1} parent=11 // pred_check_branch
          %198 = sbr.rel (%p196) target = $region16
        $region15: #{tpu_custom_call.1} parent=11 // pred_region
          _
        $region16: #{tpu_custom_call.1} parent=11 // pred_fallthru
          _
        // Predicated region
        $region17: #{tpu_custom_call.1} parent=11 // pred_check
          %p199 = pneg %p132
        $region18: #{tpu_custom_call.1} parent=11 // pred_check_branch
          %201 = sbr.rel (%p199) target = $region20
        $region19: #{tpu_custom_call.1} parent=11 // pred_region
          _
        $region20: #{tpu_custom_call.1} parent=11 // pred_fallthru
          _
        // Predicated region
        $region21: #{tpu_custom_call.1} parent=11 // pred_check
          %p202 = pneg %p153
        $region22: #{tpu_custom_call.1} parent=11 // pred_check_branch
          %204 = sbr.rel (%p202) target = $region24
        $region23: #{tpu_custom_call.1} parent=11 // pred_region
          _
        $region24: #{tpu_custom_call.1} parent=11 // pred_fallthru
          _
      $region12: #{tpu_custom_call.1} parent=5 // pred_fallthru
        _
      %p205 = scmp.lt.s32.totalorder %s20, 4
      // Predicated region
      $region25: #{tpu_custom_call.1} parent=5 // pred_check
        %p206 = pneg %p205
      $region26: #{tpu_custom_call.1} parent=5 // pred_check_branch
        %208 = sbr.rel (%p206) target = $region28
      $region27: #{tpu_custom_call.1} parent=5 // pred_region
        // Predicated region
        $region29: #{tpu_custom_call.1} parent=27 // pred_check
          %p209 = pneg %p54
        $region30: #{tpu_custom_call.1} parent=27 // pred_check_branch
          %211 = sbr.rel (%p209) target = $region32
        $region31: #{tpu_custom_call.1} parent=27 // pred_region
          %s212 = sand.u32 %s44, 1
          %s213 = scalar_lea.sflag [#allocation3], %s212
          %s214 = sand.u32 %s44, 1
          %s215 = smul.addr %s214, 8
          %s216 = scalar_lea.vmem [#allocation2], %s215
          %s218 = ssub.s32 128, 128
          %219 = vsyncadd %s213, %s218
          %s220 = smul.addr %s27, 3
          %s221 = sadd.s32 %s28, %s220
          %s222 = smul.addr %s221, 128
          %s223 = scalar_lea.hbm %s0, %s222
          %s225 = sshll.u32 %s216, 4
          %s226 = int_to_ptr.vmem [resolvable:$true] %s225
          %228 = dma.hbm_to_vmem [thread:$0]  %s223, 128, %s226, %s213
        $region32: #{tpu_custom_call.1} parent=27 // pred_fallthru
          _
        // Predicated region
        $region33: #{tpu_custom_call.1} parent=27 // pred_check
          %p229 = pneg %p84
        $region34: #{tpu_custom_call.1} parent=27 // pred_check_branch
          %231 = sbr.rel (%p229) target = $region36
        $region35: #{tpu_custom_call.1} parent=27 // pred_region
          %s232 = sand.u32 %s74, 1
          %s233 = scalar_lea.sflag [#allocation6], %s232
          %s234 = sand.u32 %s74, 1
          %s235 = smul.addr %s234, 8
          %s236 = scalar_lea.vmem [#allocation5], %s235
          %s237 = sadd.s32 %s28, 1
          %s239 = ssub.s32 128, 128
          %240 = vsyncadd %s233, %s239
          %s241 = smul.addr %s27, 3
          %s242 = sadd.s32 %s237, %s241
          %s243 = smul.addr %s242, 128
          %s244 = scalar_lea.hbm %s1, %s243
          %s246 = sshll.u32 %s236, 4
          %s247 = int_to_ptr.vmem [resolvable:$true] %s246
          %249 = dma.hbm_to_vmem [thread:$0]  %s244, 128, %s247, %s233
        $region36: #{tpu_custom_call.1} parent=27 // pred_fallthru
          _
      $region28: #{tpu_custom_call.1} parent=5 // pred_fallthru
        _
      %p250 = scmp.le.s32.totalorder 1, %s20
      %p251 = scmp.lt.s32.totalorder %s20, 5
      %p252 = pnand %p250, %p251
      %p253 = pneg %p252
      // Predicated region
      $region37: #{tpu_custom_call.1} parent=5 // pred_check
        _
      $region38: #{tpu_custom_call.1} parent=5 // pred_check_branch
        %255 = sbr.rel (%p252) target = $region40
      $region39: #{tpu_custom_call.1} parent=5 // pred_region
        %s256 = ssub.s32 %s20, 1
        %s257 = sand.u32 %s47, 1
        %s258 = scalar_lea.sflag [#allocation3], %s257
        %s259 = sand.u32 %s47, 1
        %s260 = smul.addr %s259, 8
        %s261 = scalar_lea.vmem [#allocation2], %s260
        // Predicated region
        $region41: #{tpu_custom_call.1} parent=39 // pred_check
          %p262 = pneg %p60
        $region42: #{tpu_custom_call.1} parent=39 // pred_check_branch
          %264 = sbr.rel (%p262) target = $region44
        $region43: #{tpu_custom_call.1} parent=39 // pred_region
          %265 = dma.done %s258, 128
        $region44: #{tpu_custom_call.1} parent=39 // pred_fallthru
          _
        %s266 = sand.u32 %s77, 1
        %s267 = scalar_lea.sflag [#allocation6], %s266
        %s268 = sand.u32 %s77, 1
        %s269 = smul.addr %s268, 8
        %s270 = scalar_lea.vmem [#allocation5], %s269
        // Predicated region
        $region45: #{tpu_custom_call.1} parent=39 // pred_check
          %p271 = pneg %p90
        $region46: #{tpu_custom_call.1} parent=39 // pred_check_branch
          %273 = sbr.rel (%p271) target = $region48
        $region47: #{tpu_custom_call.1} parent=39 // pred_region
          %274 = dma.done %s267, 128
        $region48: #{tpu_custom_call.1} parent=39 // pred_fallthru
          _
        %s275 = sand.u32 %s47, 1
        %s276 = scalar_lea.sflag [#allocation3], %s275
        %s277 = sand.u32 %s47, 1
        %s278 = smul.addr %s277, 8
        %s279 = scalar_lea.vmem [#allocation2], %s278
        %p280 = pneg %p60
        %p281 = pneg %p57
        %s282 = sand.u32 %s77, 1
        %s283 = scalar_lea.sflag [#allocation6], %s282
        %s284 = sand.u32 %s77, 1
        %s285 = smul.addr %s284, 8
        %s286 = scalar_lea.vmem [#allocation5], %s285
        %p287 = pneg %p90
        %p288 = pneg %p87
        %p289 = pneg %p111
        %p290 = pneg %p108
        %p291 = pneg %p132
        %p292 = pneg %p129
        %p293 = pneg %p153
        %p294 = pneg %p150
        %p295 = pneg %p181
        %p296 = pneg %p178
        %s297 = sand.u32 %s168, 1
        %s298 = scalar_lea.sflag [#allocation4], %s297
        %s299 = sand.u32 %s168, 1
        %s300 = smul.addr %s299, 8
        %s301 = scalar_lea.vmem [#allocation7], %s300
        %s302 = sadd.s32 %s30, 1
        %v303 = vld [vmem:[%s261] sm:$0xff]
        %v304 = vld [vmem:[%s270] sm:$0xff]
        %v305 = vld [vmem:[%s4] sm:$0x1]
        %vm306 = vcmp.ge.s32.totalorder %v305, 1
        %vm307 = vcmp.lt.s32.totalorder %v305, 17
        %vm308 = vmand %vm306, %vm307
        %v309 = vsel %vm308, 1, 0
        %v310 = vlaneseq
        %v311 = vshrl.u32 %v310, 7
        %v312 = vsub.s32 0, %v311
        %v313 = vrot.slane %v309, %v312
        %vm314 = vcmp.eq.s32.totalorder %v313, 1
        %v315 = vsel %vm314, %v303, 0.0
        %vm316 = vcmp.ge.s32.totalorder %v305, 4294967295
        %vm317 = vcmp.lt.s32.totalorder %v305, 15
        %vm318 = vmand %vm316, %vm317
        %v319 = vsel %vm318, 1, 0
        %v320 = vlaneseq
        %v321 = vshrl.u32 %v320, 7
        %v322 = vsub.s32 0, %v321
        %v323 = vrot.slane %v319, %v322
        %vm324 = vcmp.eq.s32.totalorder %v323, 1
        %327 = vrot.lane.b32.xlu0 %v303, 126
        %v328 = vpop.permute.xlu0 %327
        %329 = vrot.lane.b32.xlu0 %v304, 126
        %v330 = vpop.permute.xlu0 %329
        %vm331 = vcmask 1031168
        %v332 = vsel %vm331, %v328, %v330
        %v334 = vsel %vm324, %v332, 0.0
        %335 = vrot.lane.b32.xlu0 %v303, 112
        %v336 = vpop.permute.xlu0 %335
        %337 = vrot.lane.b32.xlu0 %v304, 112
        %v338 = vpop.permute.xlu0 %337
        %vm339 = vcmask 916480
        %v340 = vsel %vm339, %v336, %v338
        %v342 = vsel %vm314, %v340, 0.0
        %343 = vrot.lane.b32.xlu0 %v303, 110
        %v344 = vpop.permute.xlu0 %343
        %345 = vrot.lane.b32.xlu0 %v304, 110
        %v346 = vpop.permute.xlu0 %345
        %vm347 = vcmask 900096
        %v348 = vsel %vm347, %v344, %v346
        %v350 = vsel %vm324, %v348, 0.0
        %351 = vrot.lane.b32.xlu0 %v303, 96
        %v352 = vpop.permute.xlu0 %351
        %353 = vrot.lane.b32.xlu0 %v304, 96
        %v354 = vpop.permute.xlu0 %353
        %vm355 = vcmask 785408
        %v356 = vsel %vm355, %v352, %v354
        %v358 = vsel %vm314, %v356, 0.0
        %359 = vrot.lane.b32.xlu0 %v303, 94
        %v360 = vpop.permute.xlu0 %359
        %361 = vrot.lane.b32.xlu0 %v304, 94
        %v362 = vpop.permute.xlu0 %361
        %vm363 = vcmask 769024
        %v364 = vsel %vm363, %v360, %v362
        %v366 = vsel %vm324, %v364, 0.0
        %367 = vrot.lane.b32.xlu0 %v303, 127
        %v368 = vpop.permute.xlu0 %367
        %369 = vrot.lane.b32.xlu0 %v304, 127
        %v370 = vpop.permute.xlu0 %369
        %vm371 = vcmask 1039360
        %v372 = vsel %vm371, %v368, %v370
        %374 = vrot.lane.b32.xlu0 %v303, 111
        %v375 = vpop.permute.xlu0 %374
        %376 = vrot.lane.b32.xlu0 %v304, 111
        %v377 = vpop.permute.xlu0 %376
        %vm378 = vcmask 908288
        %v379 = vsel %vm378, %v375, %v377
        %381 = vrot.lane.b32.xlu0 %v303, 95
        %v382 = vpop.permute.xlu0 %381
        %383 = vrot.lane.b32.xlu0 %v304, 95
        %v384 = vpop.permute.xlu0 %383
        %vm385 = vcmask 777216
        %v386 = vsel %vm385, %v382, %v384
        %v388 = vld [vmem:[%s2] sm:$0xff]
        %v389 = vld [vmem:[%s3] sm:$0xff]
        %391 = vset.pattern.permute.xlu0 0
        %392 = vperm.xlu0 %391, %v389
        %v393 = vpop.permute.xlu0 %392
        %vm395 = vcmask 588800
        %v397 = vsel %vm395, %v388, 0
        %399 = vmatprep.subr.mxu0 0.0
        %400 = vmatpush1.msra.mxu0 %v315
        %401 = vmatprep.subr.mxu0 0.0
        %402 = vmatpush1.msra.mxu0 %v372
        %403 = vmatprep.subr.mxu0 0.0
        %404 = vmatpush1.msra.mxu0 %v334
        %405 = vmatprep.subr.mxu0 0.0
        %406 = vmatpush1.msra.mxu0 %v342
        %407 = vmatprep.subr.mxu0 0.0
        %408 = vmatpush1.msra.mxu0 %v379
        %409 = vmatprep.subr.mxu0 0.0
        %410 = vmatpush1.msra.mxu0 %v350
        %411 = vmatprep.subr.mxu0 0.0
        %412 = vmatpush1.msra.mxu0 %v358
        %413 = vmatprep.subr.mxu0 0.0
        %414 = vmatpush1.msra.mxu0 %v386
        %415 = vmatprep.subr.mxu0 0.0
        %416 = vmatpush1.msra.mxu0 %v366
        %417 = vmatprep.subr.mxu0 0.0
        %418 = vmatpush1.msra.mxu0 0.0
        %419 = vmatprep.subr.mxu0 0.0
        %420 = vmatpush1.msra.mxu0 0.0
        %421 = vmatprep.subr.mxu0 0.0
        %422 = vmatpush1.msra.mxu0 0.0
        %423 = vmatprep.subr.mxu0 0.0
        %424 = vmatpush1.msra.mxu0 0.0
        %425 = vmatprep.subr.mxu0 0.0
        %426 = vmatpush1.msra.mxu0 0.0
        %427 = vmatprep.subr.mxu0 0.0
        %428 = vmatpush1.msra.mxu0 0.0
        %429 = vmatprep.subr.mxu0 0.0
        %430 = vmatpush1.msra.mxu0 0.0
        %431 = vmatprep.subr.mxu0 0.0
        %432 = vmatpush1.msra.mxu0 0.0
        %433 = vmatprep.subr.mxu0 0.0
        %434 = vmatpush1.msra.mxu0 0.0
        %435 = vmatprep.subr.mxu0 0.0
        %436 = vmatpush1.msra.mxu0 0.0
        %437 = vmatprep.subr.mxu0 0.0
        %438 = vmatpush1.msra.mxu0 0.0
        %439 = vmatprep.subr.mxu0 0.0
        %440 = vmatpush1.msra.mxu0 0.0
        %441 = vmatprep.subr.mxu0 0.0
        %442 = vmatpush1.msra.mxu0 0.0
        %443 = vmatprep.subr.mxu0 0.0
        %444 = vmatpush1.msra.mxu0 0.0
        %445 = vmatprep.subr.mxu0 0.0
        %446 = vmatpush1.msra.mxu0 0.0
        %447 = vmatprep.subr.mxu0 0.0
        %448 = vmatpush1.msra.mxu0 0.0
        %449 = vmatprep.subr.mxu0 0.0
        %450 = vmatpush1.msra.mxu0 0.0
        %451 = vmatprep.subr.mxu0 0.0
        %452 = vmatpush1.msra.mxu0 0.0
        %453 = vmatprep.subr.mxu0 0.0
        %454 = vmatpush1.msra.mxu0 0.0
        %455 = vmatprep.subr.mxu0 0.0
        %456 = vmatpush1.msra.mxu0 0.0
        %457 = vmatprep.subr.mxu0 0.0
        %458 = vmatpush1.msra.mxu0 0.0
        %459 = vmatprep.subr.mxu0 0.0
        %460 = vmatpush1.msra.mxu0 0.0
        %461 = vmatprep.subr.mxu0 0.0
        %462 = vmatpush1.msra.mxu0 0.0
        %463 = vmatprep.mubr.f32.mxu0 0.0
        %464 = vmatmul.mubr.f32.gmra.mrb[0].mxu0 %v397
        %v465 = vpop.f32.mrb[0].mxu0
        %v466 = vadd.f32 %v393, %v465
        %v467 = vpop.f32.mrb[0].mxu0
        %468 = vdwg.mxu0
        %v469 = vmax.f32 %v466, 0.0
        %470 = vst [vmem:[%s301] sm:$0xff] %v469
        %s471 = sand.u32 %s168, 1
        %s472 = scalar_lea.sflag [#allocation4], %s471
        %s473 = sand.u32 %s168, 1
        %s474 = smul.addr %s473, 8
        %s475 = scalar_lea.vmem [#allocation7], %s474
        // Predicated region
        $region49: #{tpu_custom_call.1} parent=39 // pred_check
          %p476 = pneg %p178
        $region50: #{tpu_custom_call.1} parent=39 // pred_check_branch
          %478 = sbr.rel (%p476) target = $region52
        $region51: #{tpu_custom_call.1} parent=39 // pred_region
          %s480 = ssub.s32 128, 128
          %481 = vsyncadd %s472, %s480
          %s482 = smul.addr %s29, 2
          %s483 = sadd.s32 %s30, %s482
          %s484 = smul.addr %s483, 128
          %s485 = scalar_lea.hbm %s5, %s484
          %s487 = sshll.u32 %s475, 4
          %s488 = int_to_ptr.vmem [resolvable:$true] %s487
          %490 = dma.vmem_to_hbm [thread:$0]  %s488, 128, %s485, %s472
        $region52: #{tpu_custom_call.1} parent=39 // pred_fallthru
          _
      $region40: #{tpu_custom_call.1} parent=5 // pred_fallthru
        _
      %p491 = scmp.le.s32.totalorder 2, %s20
      // Predicated region
      $region53: #{tpu_custom_call.1} parent=5 // pred_check
        %p492 = pneg %p491
      $region54: #{tpu_custom_call.1} parent=5 // pred_check_branch
        %494 = sbr.rel (%p492) target = $region56
      $region55: #{tpu_custom_call.1} parent=5 // pred_region
        %s495 = ssub.s32 %s20, 2
        // Predicated region
        $region57: #{tpu_custom_call.1} parent=55 // pred_check
          %p496 = pneg %p184
        $region58: #{tpu_custom_call.1} parent=55 // pred_check_branch
          %498 = sbr.rel (%p496) target = $region60
        $region59: #{tpu_custom_call.1} parent=55 // pred_region
          %s499 = sand.u32 %s169, 1
          %s500 = scalar_lea.sflag [#allocation4], %s499
          %s501 = sand.u32 %s169, 1
          %s502 = smul.addr %s501, 8
          %s503 = scalar_lea.vmem [#allocation7], %s502
          %504 = dma.done %s500, 128
        $region60: #{tpu_custom_call.1} parent=55 // pred_fallthru
          _
      $region56: #{tpu_custom_call.1} parent=5 // pred_fallthru
        _
    $region6: #{tpu_custom_call.1} parent=1 // loop_footer
      %s24 = sadd.s32 1, %s20
    $region7: #{tpu_custom_call.1} parent=1 // loop_footer_branch
      %19 = sbr.rel target = $region3
    $region8: #{tpu_custom_call.1} parent=1 // loop_exit
      _
    %505 = vsyncpa [#allocation3], 1
    %s506 = scalar_lea.sflag [#allocation3], 1
    %507 = vsyncpa %s506, 1
    %508 = vsyncpa [#allocation6], 1
    %s509 = scalar_lea.sflag [#allocation6], 1
    %510 = vsyncpa %s509, 1
    %511 = vsyncpa [#allocation4], 1
    %s512 = scalar_lea.sflag [#allocation4], 1
    %513 = vsyncpa %s512, 1

</llo_original>
